<compile_context>
chip_gen: v6e
topology: v6e:2x2x1
jax: 0.10.0
libtpu: 0.0.40
codegen_flags: <defaults>
</compile_context>

<pallas_src>
import jax
import jax.numpy as jnp
import numpy as np
from jax.experimental import pallas as pl
from jax.experimental.pallas import tpu as pltpu


def _round_up(a, b):
    return (a + b - 1) // b * b


# ---------- Pass 1: conv-as-matmul (transposed, lane-dense) + partial BN stats ----------
def conv_stats_kernel(wt_ref, pt_ref, y_ref, psum_ref, psq_ref):
    # wt_ref  : (Cp, Kp)  bf16   weight, rows = out channels (sublanes)
    # pt_ref  : (Kp, tm)  bf16   patch tile, columns = output pixels (lane-dense)
    # y_ref   : (Cp, tm)  f32    conv output tile (lane-dense unmasked store)
    # psum_ref/psq_ref : (Cp, 128) f32   per-tile partial sum / sum-of-squares
    y = jnp.dot(wt_ref[...], pt_ref[...], preferred_element_type=jnp.float32)  # MXU, f32 acc
    y_ref[...] = y
    s = jnp.sum(y, axis=1, keepdims=True)        # (Cp, 1) per-channel partial sum
    sq = jnp.sum(y * y, axis=1, keepdims=True)   # (Cp, 1) per-channel partial sum of squares
    psum_ref[...] = jnp.broadcast_to(s, psum_ref.shape)
    psq_ref[...] = jnp.broadcast_to(sq, psq_ref.shape)


# ---------- Pass 2: fused BN affine + ReLU epilogue, in place over y ----------
def bn_relu_kernel(scale_ref, shift_ref, y_ref, o_ref):
    # one FMA per element + ReLU; lane-dense unmasked stores
    o_ref[...] = jnp.maximum(y_ref[...] * scale_ref[...] + shift_ref[...], 0.0)


def conv_block(x, weight, gamma, beta, *, stride=2, padding=1, eps=1e-5, tile_m=512):
    """x: (N, C_in, H, W) NCHW; weight: (C_out, C_in, KH, KW) OIHW.
    Returns (N, C_out, HO, WO) NCHW, matching ConvBlock.forward in train mode
    (activations only; BN running-stat buffers are not modeled)."""
    N, C_in, H, W = x.shape
    C_out, _, KH, KW = weight.shape
    HO = (H + 2 * padding - KH) // stride + 1
    WO = (W + 2 * padding - KW) // stride + 1
    M = N * HO * WO
    Kd = KH * KW * C_in

    # padded / aligned problem sizes
    Cp = _round_up(C_out, 8)                  # out channels on sublanes
    Kp = _round_up(Kd, 16)                    # contraction dim, bf16 sublane packing
    tm = min(tile_m, _round_up(M, 128))       # lane tile (multiple of 128)
    Mp = _round_up(M, tm)
    nt = Mp // tm

    # ---- glue (data movement only): build transposed patch matrix P^T (Kd, M) in bf16 ----
    xb = x.astype(jnp.bfloat16)
    x_pad = jnp.pad(xb, ((0, 0), (0, 0), (padding, padding), (padding, padding)))
    taps = []
    for kh in range(KH):
        for kw in range(KW):
            taps.append(x_pad[:, :, kh:kh + stride * HO:stride, kw:kw + stride * WO:stride])
    # (KH*KW, N, Cin, HO, WO) -> (KH*KW, Cin, N, HO, WO) -> (Kd, M); row order (kh, kw, cin)
    PT = jnp.stack(taps, axis=0).transpose(0, 2, 1, 3, 4).reshape(Kd, M)
    PT = jnp.pad(PT, ((0, Kp - Kd), (0, Mp - M)))                       # zeros -> stats exact
    # OIHW -> (Cout, KH, KW, Cin) -> (Cout, Kd) matching (kh, kw, cin) column order
    WT = jnp.transpose(weight, (0, 2, 3, 1)).reshape(C_out, Kd).astype(jnp.bfloat16)
    WT = jnp.pad(WT, ((0, Cp - C_out), (0, Kp - Kd)))

    # ---- pass 1: conv + partial batch statistics ----
    y, psum, psq = pl.pallas_call(
        conv_stats_kernel,
        out_shape=(jax.ShapeDtypeStruct((Cp, Mp), jnp.float32),
                   jax.ShapeDtypeStruct((Cp, nt * 128), jnp.float32),
                   jax.ShapeDtypeStruct((Cp, nt * 128), jnp.float32)),
        grid=(nt,),
        in_specs=[pl.BlockSpec((Cp, Kp), lambda i: (0, 0)),
                  pl.BlockSpec((Kp, tm), lambda i: (0, i))],
        out_specs=(pl.BlockSpec((Cp, tm), lambda i: (0, i)),
                   pl.BlockSpec((Cp, 128), lambda i: (0, i)),
                   pl.BlockSpec((Cp, 128), lambda i: (0, i))),
        compiler_params=pltpu.CompilerParams(dimension_semantics=("parallel",)),
    )(WT, PT)

    # ---- tiny per-channel reduction + BN affine folding (Cp-sized, plain JAX) ----
    sums = psum.reshape(Cp, nt, 128)[:, :, 0].sum(axis=1)               # (Cp,)
    sqs = psq.reshape(Cp, nt, 128)[:, :, 0].sum(axis=1)                 # (Cp,)
    mean = sums / float(M)                                              # TRUE count, pad-safe
    var = jnp.maximum(sqs / float(M) - mean * mean, 0.0)                # biased, single-pass
    inv = jax.lax.rsqrt(var + eps)
    gamma_p = jnp.pad(gamma.astype(jnp.float32), (0, Cp - C_out))
    beta_p = jnp.pad(beta.astype(jnp.float32), (0, Cp - C_out))
    scale = (gamma_p * inv).reshape(Cp, 1)
    shift = (beta_p - mean * gamma_p * inv).reshape(Cp, 1)

    # ---- pass 2: fused normalize + ReLU, written in place over y ----
    out_full = pl.pallas_call(
        bn_relu_kernel,
        out_shape=jax.ShapeDtypeStruct((Cp, Mp), jnp.float32),
        grid=(nt,),
        in_specs=[pl.BlockSpec((Cp, 1), lambda i: (0, 0)),
                  pl.BlockSpec((Cp, 1), lambda i: (0, 0)),
                  pl.BlockSpec((Cp, tm), lambda i: (0, i))],
        out_specs=pl.BlockSpec((Cp, tm), lambda i: (0, i)),
        input_output_aliases={2: 0},
        compiler_params=pltpu.CompilerParams(dimension_semantics=("parallel",)),
    )(scale, shift, y)

    # (Cp, Mp) -> (Cout, N, HO, WO) -> NCHW (public PyTorch layout)
    out = out_full[:C_out, :M].reshape(C_out, N, HO, WO)
    return jnp.transpose(out, (1, 0, 2, 3))


def reference(x, weight, gamma, beta, *, stride=2, padding=1, eps=1e-5):
    # bf16-round the conv operands exactly like the kernel path (f32 accumulation).
    xb = x.astype(jnp.bfloat16).astype(jnp.float32)
    wb = weight.astype(jnp.bfloat16).astype(jnp.float32)
    y = jax.lax.conv_general_dilated(
        xb, wb, window_strides=(stride, stride),
        padding=[(padding, padding), (padding, padding)],
        dimension_numbers=("NCHW", "OIHW", "NCHW"))
    mean = jnp.mean(y, axis=(0, 2, 3), keepdims=True)
    var = jnp.mean((y - mean) ** 2, axis=(0, 2, 3), keepdims=True)
    y_hat = (y - mean) * jax.lax.rsqrt(var + eps) \
        * gamma.reshape(1, -1, 1, 1) + beta.reshape(1, -1, 1, 1)
    return jnp.maximum(y_hat, 0.0)


if __name__ == "__main__":
    # Deterministic parameter init (shapes from ConvBlock.__init__):
    #   conv1.weight : (out_channels, in_channels, 3, 3), no bias
    #   bn.weight    : ones(out_channels)   (PyTorch default)
    #   bn.bias      : zeros(out_channels)  (PyTorch default)
    N, C_in, H, W = 2, 4, 16, 16
    C_out = 8
    key = jax.random.PRNGKey(0)
    kx, kw = jax.random.split(key)
    x = jax.random.normal(kx, (N, C_in, H, W), dtype=jnp.float32)
    fan_in = C_in * 3 * 3
    weight = jax.random.normal(kw, (C_out, C_in, 3, 3), dtype=jnp.float32) * (1.0 / np.sqrt(fan_in))
    gamma = jnp.ones((C_out,), dtype=jnp.float32)
    beta = jnp.zeros((C_out,), dtype=jnp.float32)
    # TODO(synk): BatchNorm running_mean/running_var state updates (training side effect)
    # are not modeled; the returned activations (which don't depend on them) are exact.

    fn = jax.jit(conv_block)
    out = jax.block_until_ready(fn(x, weight, gamma, beta))

    ref = reference(x, weight, gamma, beta)
    np.testing.assert_allclose(np.asarray(out), np.asarray(ref), rtol=1e-3, atol=1e-3)
    assert out.shape == (N, C_out, H // 2, W // 2)
    print("KERNEL_OK")
</pallas_src>

<mosaic_0001>
module attributes {stable_mosaic.version = 11 : i64} {
  func.func @bn_relu_kernel(%arg0: i32, %arg1: memref<8x1xf32, #tpu.memory_space<vmem>>, %arg2: memref<8x1xf32, #tpu.memory_space<vmem>>, %arg3: memref<8x128xf32, #tpu.memory_space<vmem>>, %arg4: memref<8x128xf32, #tpu.memory_space<vmem>>) attributes {dimension_semantics = [#tpu.dimension_semantics<parallel>], iteration_bounds = array<i64: 1>, scalar_prefetch = 0 : i64, scratch_operands = 0 : i64, tpu.core_type = #tpu.core_type<tc>, window_params = [{pipeline_mode = #tpu.pipeline_mode<synchronous>, transform_indices = @transform_0, window_bounds = array<i64: 8, 1>}, {pipeline_mode = #tpu.pipeline_mode<synchronous>, transform_indices = @transform_1, window_bounds = array<i64: 8, 1>}, {transform_indices = @transform_2, window_bounds = array<i64: 8, 128>}, {transform_indices = @transform_3, window_bounds = array<i64: 8, 128>}]} {
    %c0 = arith.constant 0 : index
    %c0_0 = arith.constant 0 : index
    %0 = vector.load %arg3[%c0, %c0_0] : memref<8x128xf32, #tpu.memory_space<vmem>>, vector<8x128xf32>
    %c0_1 = arith.constant 0 : index
    %c0_2 = arith.constant 0 : index
    %1 = vector.load %arg1[%c0_1, %c0_2] : memref<8x1xf32, #tpu.memory_space<vmem>>, vector<8x1xf32>
    %2 = vector.broadcast %1 : vector<8x1xf32> to vector<8x128xf32>
    %3 = arith.mulf %0, %2 : vector<8x128xf32>
    %c0_3 = arith.constant 0 : index
    %c0_4 = arith.constant 0 : index
    %4 = vector.load %arg2[%c0_3, %c0_4] : memref<8x1xf32, #tpu.memory_space<vmem>>, vector<8x1xf32>
    %5 = vector.broadcast %4 : vector<8x1xf32> to vector<8x128xf32>
    %6 = arith.addf %3, %5 : vector<8x128xf32>
    %cst = arith.constant 0.000000e+00 : f32
    %7 = vector.broadcast %cst : f32 to vector<8x128xf32>
    %8 = arith.maximumf %6, %7 : vector<8x128xf32>
    %c0_5 = arith.constant 0 : index
    %c0_6 = arith.constant 0 : index
    %9 = vector.load %arg4[%c0_5, %c0_6] : memref<8x128xf32, #tpu.memory_space<vmem>>, vector<8x128xf32>
    tpu.vector_store %arg4[%c0_5, %c0_6], %8 {strides = array<i32>} : memref<8x128xf32, #tpu.memory_space<vmem>>, vector<8x128xf32>,
    return
  }
  func.func @transform_0(%arg0: i32) -> (i32, i32) {
    %c0_i32 = arith.constant 0 : i32
    %c0_i32_0 = arith.constant 0 : i32
    %c0_i32_1 = arith.constant 0 : i32
    return %c0_i32, %c0_i32_0 : i32, i32
  }
  func.func @transform_1(%arg0: i32) -> (i32, i32) {
    %c0_i32 = arith.constant 0 : i32
    %c0_i32_0 = arith.constant 0 : i32
    %c0_i32_1 = arith.constant 0 : i32
    return %c0_i32, %c0_i32_0 : i32, i32
  }
  func.func @transform_2(%arg0: i32) -> (i32, i32) {
    %c0_i32 = arith.constant 0 : i32
    %c0_i32_0 = arith.constant 0 : i32
    return %c0_i32, %arg0 : i32, i32
  }
  func.func @transform_3(%arg0: i32) -> (i32, i32) {
    %c0_i32 = arith.constant 0 : i32
    %c0_i32_0 = arith.constant 0 : i32
    return %c0_i32, %arg0 : i32, i32
  }
}

module attributes {stable_mosaic.version = 11 : i64} {
  func.func @conv_stats_kernel(%arg0: i32, %arg1: memref<8x48xbf16, #tpu.memory_space<vmem>>, %arg2: memref<48x128xbf16, #tpu.memory_space<vmem>>, %arg3: memref<8x128xf32, #tpu.memory_space<vmem>>, %arg4: memref<8x128xf32, #tpu.memory_space<vmem>>, %arg5: memref<8x128xf32, #tpu.memory_space<vmem>>) attributes {dimension_semantics = [#tpu.dimension_semantics<parallel>], iteration_bounds = array<i64: 1>, scalar_prefetch = 0 : i64, scratch_operands = 0 : i64, tpu.core_type = #tpu.core_type<tc>, window_params = [{pipeline_mode = #tpu.pipeline_mode<synchronous>, transform_indices = @transform_0, window_bounds = array<i64: 8, 48>}, {transform_indices = @transform_1, window_bounds = array<i64: 48, 128>}, {transform_indices = @transform_2, window_bounds = array<i64: 8, 128>}, {transform_indices = @transform_3, window_bounds = array<i64: 8, 128>}, {transform_indices = @transform_4, window_bounds = array<i64: 8, 128>}]} {
    %c0 = arith.constant 0 : index
    %c0_0 = arith.constant 0 : index
    %0 = vector.load %arg1[%c0, %c0_0] : memref<8x48xbf16, #tpu.memory_space<vmem>>, vector<8x48xbf16>
    %c0_1 = arith.constant 0 : index
    %c0_2 = arith.constant 0 : index
    %1 = vector.load %arg2[%c0_1, %c0_2] : memref<48x128xbf16, #tpu.memory_space<vmem>>, vector<48x128xbf16>
    %cst = arith.constant dense<0.000000e+00> : vector<8x128xf32>
    %2 = tpu.matmul %0, %1, %cst {dimension_numbers = #tpu.dot_dimension_numbers<[1], [0], [0], [1], [0, 0, 1, 1], [], []>} : vector<8x48xbf16>, vector<48x128xbf16>, vector<8x128xf32> -> vector<8x128xf32>
    %c0_3 = arith.constant 0 : index
    %c0_4 = arith.constant 0 : index
    %3 = vector.load %arg3[%c0_3, %c0_4] : memref<8x128xf32, #tpu.memory_space<vmem>>, vector<8x128xf32>
    tpu.vector_store %arg3[%c0_3, %c0_4], %2 {strides = array<i32>} : memref<8x128xf32, #tpu.memory_space<vmem>>, vector<8x128xf32>,
    %cst_5 = arith.constant dense<0.000000e+00> : vector<8xf32>
    %4 = vector.multi_reduction <add>, %2, %cst_5 [1] : vector<8x128xf32> to vector<8xf32>
    %5 = vector.shape_cast %4 : vector<8xf32> to vector<8x1xf32>
    %6 = arith.mulf %2, %2 : vector<8x128xf32>
    %cst_6 = arith.constant dense<0.000000e+00> : vector<8xf32>
    %7 = vector.multi_reduction <add>, %6, %cst_6 [1] : vector<8x128xf32> to vector<8xf32>
    %8 = vector.shape_cast %7 : vector<8xf32> to vector<8x1xf32>
    %9 = vector.shape_cast %5 : vector<8x1xf32> to vector<8x1xf32>
    %10 = vector.broadcast %9 : vector<8x1xf32> to vector<8x128xf32>
    %c0_7 = arith.constant 0 : index
    %c0_8 = arith.constant 0 : index
    %11 = vector.load %arg4[%c0_7, %c0_8] : memref<8x128xf32, #tpu.memory_space<vmem>>, vector<8x128xf32>
    tpu.vector_store %arg4[%c0_7, %c0_8], %10 {strides = array<i32>} : memref<8x128xf32, #tpu.memory_space<vmem>>, vector<8x128xf32>,
    %12 = vector.shape_cast %8 : vector<8x1xf32> to vector<8x1xf32>
    %13 = vector.broadcast %12 : vector<8x1xf32> to vector<8x128xf32>
    %c0_9 = arith.constant 0 : index
    %c0_10 = arith.constant 0 : index
    %14 = vector.load %arg5[%c0_9, %c0_10] : memref<8x128xf32, #tpu.memory_space<vmem>>, vector<8x128xf32>
    tpu.vector_store %arg5[%c0_9, %c0_10], %13 {strides = array<i32>} : memref<8x128xf32, #tpu.memory_space<vmem>>, vector<8x128xf32>,
    return
  }
  func.func @transform_0(%arg0: i32) -> (i32, i32) {
    %c0_i32 = arith.constant 0 : i32
    %c0_i32_0 = arith.constant 0 : i32
    %c0_i32_1 = arith.constant 0 : i32
    return %c0_i32, %c0_i32_0 : i32, i32
  }
  func.func @transform_1(%arg0: i32) -> (i32, i32) {
    %c0_i32 = arith.constant 0 : i32
    %c0_i32_0 = arith.constant 0 : i32
    return %c0_i32, %arg0 : i32, i32
  }
  func.func @transform_2(%arg0: i32) -> (i32, i32) {
    %c0_i32 = arith.constant 0 : i32
    %c0_i32_0 = arith.constant 0 : i32
    return %c0_i32, %arg0 : i32, i32
  }
  func.func @transform_3(%arg0: i32) -> (i32, i32) {
    %c0_i32 = arith.constant 0 : i32
    %c0_i32_0 = arith.constant 0 : i32
    return %c0_i32, %arg0 : i32, i32
  }
  func.func @transform_4(%arg0: i32) -> (i32, i32) {
    %c0_i32 = arith.constant 0 : i32
    %c0_i32_0 = arith.constant 0 : i32
    return %c0_i32, %arg0 : i32, i32
  }
}

</mosaic_0001>

<llo_original>
// kernel: conv_block.3
$region0: #{conv_block.3}
  #allocation0 [shape = 'u32[]', space=smem, size = 0x4, offset = 0x4, fixed_abs, tag = 'smem constant byte address 0x4 - core index']
  #allocation1 [shape = 'u32[144,128]{1,0:T(1,128)}', space=vmem, size = 0x12000, scoped, tag = 'internal scratch']
  %s0 = inlined_call_operand.vmem [shape: f32[8,1], index: 0, kind: input, shape index: {}]
  %s1 = inlined_call_operand.vmem [shape: f32[8,1], index: 1, kind: input, shape index: {}]
  %s2 = inlined_call_operand.vmem [shape: f32[8,128], index: 2, kind: input, shape index: {}, may-alias: {2,3}]
  %s3 = inlined_call_operand.vmem [shape: f32[8,128], index: 3, kind: output, shape index: {}, may-alias: {2,3}]
  %s4 = sld [smem:[#allocation0]]
  $region22: #{conv_block.3} parent=0
    _
  %s6 = ssub.s32 1, %s4
  %s7 = scalar_select 0, %s6, %s4
  // Predicated region
  $region2: #{conv_block.3} parent=0 // pred_check
    _
  $region3: #{conv_block.3} parent=0 // pred_check_branch
    %9 = sbr.rel (0) target = $region5
  $region4: #{conv_block.3} parent=0 // pred_region
    _
  $region5: #{conv_block.3} parent=0 // pred_fallthru
    _
  // Predicated region
  $region6: #{conv_block.3} parent=0 // pred_check
    _
  $region7: #{conv_block.3} parent=0 // pred_check_branch
    %11 = sbr.rel (0) target = $region9
  $region8: #{conv_block.3} parent=0 // pred_region
    _
  $region9: #{conv_block.3} parent=0 // pred_fallthru
    _
  // Predicated region
  $region10: #{conv_block.3} parent=0 // pred_check
    _
  $region11: #{conv_block.3} parent=0 // pred_check_branch
    %13 = sbr.rel (0) target = $region13
  $region12: #{conv_block.3} parent=0 // pred_region
    _
  $region13: #{conv_block.3} parent=0 // pred_fallthru
    _
  %v14 = vld [vmem:[%s2] sm:$0xff]
  %v15 = vld [vmem:[%s0] sm:$0xff]
  %17 = vset.pattern.permute.xlu0 0
  %18 = vperm.xlu0 %17, %v15
  %v19 = vpop.permute.xlu0 %18
  %v21 = vmul.f32 %v14, %v19
  %v22 = vld [vmem:[%s1] sm:$0xff]
  %24 = vset.pattern.permute.xlu0 0
  %25 = vperm.xlu0 %24, %v22
  %v26 = vpop.permute.xlu0 %25
  %v28 = vadd.f32 %v21, %v26
  %v29 = vmax.f32 %v28, 0.0
  %30 = vst [vmem:[%s3] sm:$0xff] %v29
  // Predicated region
  $region14: #{conv_block.3} parent=0 // pred_check
    _
  $region15: #{conv_block.3} parent=0 // pred_check_branch
    %32 = sbr.rel (0) target = $region17
  $region16: #{conv_block.3} parent=0 // pred_region
    _
  $region17: #{conv_block.3} parent=0 // pred_fallthru
    _
  // Predicated region
  $region18: #{conv_block.3} parent=0 // pred_check
    _
  $region19: #{conv_block.3} parent=0 // pred_check_branch
    %34 = sbr.rel (0) target = $region21
  $region20: #{conv_block.3} parent=0 // pred_region
    _
  $region21: #{conv_block.3} parent=0 // pred_fallthru
    _

// kernel: conv_block.2
$region0: #{conv_block.2}
  #allocation0 [shape = 'u32[]', space=smem, size = 0x4, offset = 0x4, fixed_abs, tag = 'smem constant byte address 0x4 - core index']
  #allocation1 [shape = 'u32[144,128]{1,0:T(1,128)}', space=vmem, size = 0x12000, scoped, tag = 'internal scratch']
  %s0 = inlined_call_operand.vmem [shape: bf16[8,48], index: 0, kind: input, shape index: {}]
  %s1 = inlined_call_operand.vmem [shape: bf16[48,128], index: 1, kind: input, shape index: {}]
  %s2 = inlined_call_operand.vmem [shape: f32[8,128], index: 2, kind: output, shape index: {0}]
  %s3 = inlined_call_operand.vmem [shape: f32[8,128], index: 3, kind: output, shape index: {1}]
  %s4 = inlined_call_operand.vmem [shape: f32[8,128], index: 4, kind: output, shape index: {2}]
  %5 = xla_tuple %s2, %s3, %s4
  %s6 = sld [smem:[#allocation0]]
  $region34: #{conv_block.2} parent=0
    _
  %s8 = ssub.s32 1, %s6
  %s9 = scalar_select 0, %s8, %s6
  // Predicated region
  $region2: #{conv_block.2} parent=0 // pred_check
    _
  $region3: #{conv_block.2} parent=0 // pred_check_branch
    %11 = sbr.rel (0) target = $region5
  $region4: #{conv_block.2} parent=0 // pred_region
    _
  $region5: #{conv_block.2} parent=0 // pred_fallthru
    _
  // Predicated region
  $region6: #{conv_block.2} parent=0 // pred_check
    _
  $region7: #{conv_block.2} parent=0 // pred_check_branch
    %13 = sbr.rel (0) target = $region9
  $region8: #{conv_block.2} parent=0 // pred_region
    _
  $region9: #{conv_block.2} parent=0 // pred_fallthru
    _
  %v15 = vld [vmem:[%s0] sm:$0xf]
  %v16 = vld [vmem:[%s1] sm:$0xf]
  %v17 = vld [vmem:[%s1 + $0x4] sm:$0xf]
  %v18 = vld [vmem:[%s1 + $0x8] sm:$0xf]
  %v19 = vld [vmem:[%s1 + $0xc] sm:$0xf]
  %v20 = vld [vmem:[%s1 + $0x10] sm:$0xf]
  %v21 = vld [vmem:[%s1 + $0x14] sm:$0xf]
  %v28 = vunpack.c.l.b16 %v16
  %v29 = vunpack.c.l.b16 %v17
  %v30 = vunpack.c.l.b16 %v18
  %v31 = vunpack.c.l.b16 %v19
  %v32 = vunpack.c.l.b16 %v20
  %v33 = vunpack.c.l.b16 %v21
  %v34 = vpack.c.b16 %v29, %v28
  %v35 = vpack.c.b16 %v31, %v30
  %v36 = vpack.c.b16 %v33, %v32
  %vm40 = vcmask 392192
  %v42 = vsel %vm40, %v15, 0
  %44 = vmatprep.subr.bf16.mxu0 0
  %45 = vmatpush1.bf16.msra.mxu0 0
  %46 = vmatprep.subr.bf16.mxu0 0
  %47 = vmatpush1.bf16.msra.mxu0 0
  %48 = vmatprep.subr.bf16.mxu0 0
  %49 = vmatpush1.bf16.msra.mxu0 0
  %50 = vmatprep.subr.bf16.mxu0 0
  %51 = vmatpush1.bf16.msra.mxu0 0
  %52 = vmatprep.subr.bf16.mxu0 0
  %53 = vmatpush1.bf16.msra.mxu0 0
  %54 = vmatprep.subr.bf16.mxu0 0
  %55 = vmatpush1.bf16.msra.mxu0 %v36
  %56 = vmatprep.subr.bf16.mxu0 0
  %57 = vmatpush1.bf16.msra.mxu0 %v35
  %58 = vmatprep.subr.bf16.mxu0 0
  %59 = vmatpush1.bf16.msra.mxu0 %v34
  %60 = vmatprep.subr.bf16.mxu0 0
  %61 = vmatpush2.bf16.msra.mxu0 0
  %62 = vmatprep.subr.bf16.mxu0 0
  %63 = vmatpush2.bf16.msra.mxu0 0
  %64 = vmatprep.subr.bf16.mxu0 0
  %65 = vmatpush2.bf16.msra.mxu0 0
  %66 = vmatprep.subr.bf16.mxu0 0
  %67 = vmatpush2.bf16.msra.mxu0 0
  %68 = vmatprep.subr.bf16.mxu0 0
  %69 = vmatpush2.bf16.msra.mxu0 0
  %70 = vmatprep.subr.bf16.mxu0 0
  %71 = vmatpush2.bf16.msra.mxu0 0
  %72 = vmatprep.subr.bf16.mxu0 0
  %73 = vmatpush2.bf16.msra.mxu0 0
  %74 = vmatprep.subr.bf16.mxu0 0
  %75 = vmatpush2.bf16.msra.mxu0 0
  %76 = vmatprep.mubr.bf16.mxu0 0
  %77 = vmatmul.mubr.bf16.gmra.mxu0 %v42
  %v78 = vpop.f32.mrf.mxu0
  %v79 = vadd.f32 0.0, %v78
  %v80 = vpop.f32.mrf.mxu0
  %v81 = vpop.f32.mrf.mxu0
  %v82 = vpop.f32.mrf.mxu0
  %83 = vdwg.mxu0
  %84 = vst [vmem:[%s2] sm:$0xff] %v79
  %85 = vadd.xlane.f32.xlu0 %v79
  %v86 = vpop.xlane.xlu0 %85
  %v87 = vmul.f32 %v79, %v79
  %88 = vadd.xlane.f32.xlu0 %v87
  %v89 = vpop.xlane.xlu0 %88
  %90 = vst [vmem:[%s3] sm:$0xff] %v86
  %91 = vst [vmem:[%s4] sm:$0xff] %v89
  // Predicated region
  $region10: #{conv_block.2} parent=0 // pred_check
    _
  $region11: #{conv_block.2} parent=0 // pred_check_branch
    %93 = sbr.rel (0) target = $region13
  $region12: #{conv_block.2} parent=0 // pred_region
    _
  $region13: #{conv_block.2} parent=0 // pred_fallthru
    _
  // Predicated region
  $region14: #{conv_block.2} parent=0 // pred_check
    _
  $region15: #{conv_block.2} parent=0 // pred_check_branch
    %95 = sbr.rel (0) target = $region17
  $region16: #{conv_block.2} parent=0 // pred_region
    _
  $region17: #{conv_block.2} parent=0 // pred_fallthru
    _
  // Predicated region
  $region18: #{conv_block.2} parent=0 // pred_check
    _
  $region19: #{conv_block.2} parent=0 // pred_check_branch
    %97 = sbr.rel (0) target = $region21
  $region20: #{conv_block.2} parent=0 // pred_region
    _
  $region21: #{conv_block.2} parent=0 // pred_fallthru
    _
  // Predicated region
  $region22: #{conv_block.2} parent=0 // pred_check
    _
  $region23: #{conv_block.2} parent=0 // pred_check_branch
    %99 = sbr.rel (0) target = $region25
  $region24: #{conv_block.2} parent=0 // pred_region
    _
  $region25: #{conv_block.2} parent=0 // pred_fallthru
    _
  // Predicated region
  $region26: #{conv_block.2} parent=0 // pred_check
    _
  $region27: #{conv_block.2} parent=0 // pred_check_branch
    %101 = sbr.rel (0) target = $region29
  $region28: #{conv_block.2} parent=0 // pred_region
    _
  $region29: #{conv_block.2} parent=0 // pred_fallthru
    _
  // Predicated region
  $region30: #{conv_block.2} parent=0 // pred_check
    _
  $region31: #{conv_block.2} parent=0 // pred_check_branch
    %103 = sbr.rel (0) target = $region33
  $region32: #{conv_block.2} parent=0 // pred_region
    _
  $region33: #{conv_block.2} parent=0 // pred_fallthru
    _

</llo_original>
